<compile_context>
chip_gen: v5e
topology: v5e:2x2
jax: 0.10.0
libtpu: 0.0.40
codegen_flags: <defaults>
</compile_context>

<pallas_src>
import functools

import jax
import jax.numpy as jnp
from jax.experimental import pallas as pl
from jax.experimental.pallas import tpu as pltpu


def _round_up(v, m):
    return ((v + m - 1) // m) * m


def _cdiv(a, b):
    return (a + b - 1) // b


def _mlp_kernel(x_ref, w1_ref, b1_ref, w2_ref, b2_ref, w3_ref, b3_ref, o_ref):
    """Fused 3-layer MLP on one batch tile: relu(relu(x@W1+b1)@W2+b2)@W3+b3."""
    x = x_ref[...].astype(jnp.bfloat16)  # cast in-kernel: x streams from HBM as f32
    h1 = jnp.dot(x, w1_ref[...], preferred_element_type=jnp.float32) + b1_ref[...]
    h1 = jnp.maximum(h1, 0.0).astype(jnp.bfloat16)   # ReLU (Dropout == identity in eval)
    h2 = jnp.dot(h1, w2_ref[...], preferred_element_type=jnp.float32) + b2_ref[...]
    h2 = jnp.maximum(h2, 0.0).astype(jnp.bfloat16)   # ReLU (Dropout == identity in eval)
    o_ref[...] = (
        jnp.dot(h2, w3_ref[...], preferred_element_type=jnp.float32) + b3_ref[...]
    ).astype(o_ref.dtype)


def _choose_tiling(batch, tile_target):
    """Pick (TB, grid_steps, padded_batch): TB multiple of 8, tiny row padding, even #steps on big batches."""
    b8 = _round_up(max(batch, 8), 8)
    steps = _cdiv(b8, tile_target)
    if b8 >= 1024:
        # v7x has 2 TensorCores: give the "parallel" batch axis an even number (>=2) of steps
        # so both cores get a share. Negligible cost on v5e/v6e (single TC).
        steps = _round_up(max(steps, 2), 2)
    tb = _round_up(_cdiv(b8, steps), 8)
    return tb, steps, tb * steps


@functools.partial(jax.jit, static_argnames=("n_classes", "tile_batch"))
def apk_classifier_forward(x, params, n_classes, tile_batch=4096):
    """Runs the batch-tiled fused MLP Pallas kernel.

    x:      [B, input_dim] float32 (cast to bf16 for the MXU inside the kernel)
    params: pre-transposed weights (in, out) in bf16, biases (1, out) in f32; hidden dims padded
            to 128 lanes, class dim padded only to a multiple of 8 (narrow output stream).
    """
    w1, b1 = params["w1"], params["b1"]
    w2, b2 = params["w2"], params["b2"]
    w3, b3 = params["w3"], params["b3"]
    B, input_dim = x.shape
    h1_dim, h2_dim, out_pad = w1.shape[1], w2.shape[1], w3.shape[1]

    TB, grid_steps, B_pad = _choose_tiling(B, tile_batch)
    if B_pad != B:
        # Only a handful of rows (< 8 * grid_steps + 8); negligible copy.
        x = jnp.pad(x, ((0, B_pad - B), (0, 0)))

    flops = 2 * B_pad * (input_dim * h1_dim + h1_dim * h2_dim + h2_dim * out_pad)
    bytes_accessed = (
        B_pad * input_dim * 4                      # x stream (f32)
        + B_pad * out_pad * 4                      # logits stream (f32, narrow: 8 lanes)
        + (w1.size + w2.size + w3.size) * 2        # weights (bf16, VMEM-resident)
        + (b1.size + b2.size + b3.size) * 4        # biases (f32)
    )

    const = lambda i: (0, 0)  # weights/biases resident across grid steps
    out = pl.pallas_call(
        _mlp_kernel,
        out_shape=jax.ShapeDtypeStruct((B_pad, out_pad), jnp.float32),
        grid=(grid_steps,),
        in_specs=[
            pl.BlockSpec((TB, input_dim), lambda i: (i, 0)),   # streamed batch tile (f32)
            pl.BlockSpec(w1.shape, const),
            pl.BlockSpec(b1.shape, const),
            pl.BlockSpec(w2.shape, const),
            pl.BlockSpec(b2.shape, const),
            pl.BlockSpec(w3.shape, const),
            pl.BlockSpec(b3.shape, const),
        ],
        out_specs=pl.BlockSpec((TB, out_pad), lambda i: (i, 0)),
        compiler_params=pltpu.CompilerParams(
            dimension_semantics=("parallel",),          # shards grid over both TCs on v7x
            vmem_limit_bytes=32 * 1024 * 1024,
        ),
        cost_estimate=pl.CostEstimate(
            flops=flops, transcendentals=0, bytes_accessed=bytes_accessed),
    )(x, w1, b1, w2, b2, w3, b3)
    return out[:B, :n_classes]


def init_params(key, input_dim, hidden_dims, n_classes, lane=128):
    """Deterministic synthetic parameters matching APKClassifier's layer shapes.

    Hidden dims are zero-padded to multiples of `lane` (128) for lane-dense MXU tiles; the class
    axis is padded only to a multiple of 8 (sublane) so the logits store stays narrow. Padding is
    mathematically inert (zero weight rows/cols, ReLU(0)=0). Weights are stored pre-transposed
    (in, out) in bf16; biases (1, out) in f32.
    """
    dims = [input_dim] + list(hidden_dims) + [n_classes]
    padded = ([input_dim]
              + [_round_up(d, lane) for d in hidden_dims]
              + [_round_up(n_classes, 8)])
    keys = jax.random.split(key, 2 * (len(dims) - 1))
    params = {}
    for idx, (din, dout) in enumerate(zip(dims, dims[1:])):
        pin, pout = padded[idx], padded[idx + 1]
        kw, kb = keys[2 * idx], keys[2 * idx + 1]
        bound = 1.0 / jnp.sqrt(din)
        w = jax.random.uniform(kw, (din, dout), jnp.float32, -bound, bound)
        b = jax.random.uniform(kb, (1, dout), jnp.float32, -bound, bound)
        w_pad = jnp.zeros((pin, pout), jnp.float32).at[:din, :dout].set(w)
        b_pad = jnp.zeros((1, pout), jnp.float32).at[:, :dout].set(b)
        params[f"w{idx + 1}"] = w_pad.astype(jnp.bfloat16)
        params[f"b{idx + 1}"] = b_pad
    return params


def reference_forward(x, params, n_classes):
    """Pure-JAX reference with the same numerics (bf16 operands, f32 accumulation)."""
    h = x.astype(jnp.bfloat16)
    h = jnp.maximum(
        jnp.dot(h, params["w1"], preferred_element_type=jnp.float32) + params["b1"], 0.0
    ).astype(jnp.bfloat16)
    h = jnp.maximum(
        jnp.dot(h, params["w2"], preferred_element_type=jnp.float32) + params["b2"], 0.0
    ).astype(jnp.bfloat16)
    out = jnp.dot(h, params["w3"], preferred_element_type=jnp.float32) + params["b3"]
    return out[:, :n_classes]


if __name__ == "__main__":
    INPUT_DIM = 32
    HIDDEN_DIMS = [128, 64]
    N_CLASSES = 2

    key = jax.random.PRNGKey(0)
    k_p, k_x1, k_x2 = jax.random.split(key, 3)
    params = init_params(k_p, INPUT_DIM, HIDDEN_DIMS, N_CLASSES)

    # Spec-sized smoke test (single-step grid).
    x_small = jax.random.normal(k_x1, (8, INPUT_DIM), jnp.float32)
    out_small = jax.block_until_ready(
        apk_classifier_forward(x_small, params, n_classes=N_CLASSES))
    ref_small = reference_forward(x_small, params, N_CLASSES)
    assert out_small.shape == (8, N_CLASSES), out_small.shape
    assert jnp.allclose(out_small, ref_small, atol=1e-4, rtol=1e-4), "small-batch mismatch"

    # Batch that does not divide the tile, with a forced small tile: exercises row padding and
    # the multi-step software pipeline (4 grid steps).
    x_big = jax.random.normal(k_x2, (200, INPUT_DIM), jnp.float32)
    out_big = jax.block_until_ready(
        apk_classifier_forward(x_big, params, n_classes=N_CLASSES, tile_batch=64))
    ref_big = reference_forward(x_big, params, N_CLASSES)
    assert out_big.shape == (200, N_CLASSES), out_big.shape
    assert jnp.allclose(out_big, ref_big, atol=1e-4, rtol=1e-4), "big-batch mismatch"

    print("KERNEL_OK")
</pallas_src>

<mosaic_0001>
module attributes {stable_mosaic.version = 11 : i64} {
  func.func @_mlp_kernel(%arg0: i32, %arg1: memref<8x32xf32, #tpu.memory_space<vmem>>, %arg2: memref<32x128xbf16, #tpu.memory_space<vmem>>, %arg3: memref<1x128xf32, #tpu.memory_space<vmem>>, %arg4: memref<128x128xbf16, #tpu.memory_space<vmem>>, %arg5: memref<1x128xf32, #tpu.memory_space<vmem>>, %arg6: memref<128x8xbf16, #tpu.memory_space<vmem>>, %arg7: memref<1x8xf32, #tpu.memory_space<vmem>>, %arg8: memref<8x8xf32, #tpu.memory_space<vmem>>) attributes {dimension_semantics = [#tpu.dimension_semantics<parallel>], iteration_bounds = array<i64: 1>, scalar_prefetch = 0 : i64, scratch_operands = 0 : i64, tpu.core_type = #tpu.core_type<tc>, window_params = [{transform_indices = @transform_0, window_bounds = array<i64: 8, 32>}, {pipeline_mode = #tpu.pipeline_mode<synchronous>, transform_indices = @transform_1, window_bounds = array<i64: 32, 128>}, {pipeline_mode = #tpu.pipeline_mode<synchronous>, transform_indices = @transform_2, window_bounds = array<i64: 1, 128>}, {pipeline_mode = #tpu.pipeline_mode<synchronous>, transform_indices = @transform_3, window_bounds = array<i64: 128, 128>}, {pipeline_mode = #tpu.pipeline_mode<synchronous>, transform_indices = @transform_4, window_bounds = array<i64: 1, 128>}, {pipeline_mode = #tpu.pipeline_mode<synchronous>, transform_indices = @transform_5, window_bounds = array<i64: 128, 8>}, {pipeline_mode = #tpu.pipeline_mode<synchronous>, transform_indices = @transform_6, window_bounds = array<i64: 1, 8>}, {transform_indices = @transform_7, window_bounds = array<i64: 8, 8>}]} {
    %c0 = arith.constant 0 : index
    %c0_0 = arith.constant 0 : index
    %0 = vector.load %arg1[%c0, %c0_0] : memref<8x32xf32, #tpu.memory_space<vmem>>, vector<8x32xf32>
    %1 = arith.truncf %0 : vector<8x32xf32> to vector<8x32xbf16>
    %c0_1 = arith.constant 0 : index
    %c0_2 = arith.constant 0 : index
    %2 = vector.load %arg2[%c0_1, %c0_2] : memref<32x128xbf16, #tpu.memory_space<vmem>>, vector<32x128xbf16>
    %cst = arith.constant dense<0.000000e+00> : vector<8x128xf32>
    %3 = tpu.matmul %1, %2, %cst {dimension_numbers = #tpu.dot_dimension_numbers<[1], [0], [0], [1], [0, 0, 1, 1], [], []>} : vector<8x32xbf16>, vector<32x128xbf16>, vector<8x128xf32> -> vector<8x128xf32>
    %c0_3 = arith.constant 0 : index
    %c0_4 = arith.constant 0 : index
    %4 = vector.load %arg3[%c0_3, %c0_4] : memref<1x128xf32, #tpu.memory_space<vmem>>, vector<1x128xf32>
    %5 = vector.broadcast %4 : vector<1x128xf32> to vector<8x128xf32>
    %6 = arith.addf %3, %5 : vector<8x128xf32>
    %cst_5 = arith.constant 0.000000e+00 : f32
    %7 = vector.broadcast %cst_5 : f32 to vector<8x128xf32>
    %8 = arith.maximumf %6, %7 : vector<8x128xf32>
    %9 = arith.truncf %8 : vector<8x128xf32> to vector<8x128xbf16>
    %c0_6 = arith.constant 0 : index
    %c0_7 = arith.constant 0 : index
    %10 = vector.load %arg4[%c0_6, %c0_7] : memref<128x128xbf16, #tpu.memory_space<vmem>>, vector<128x128xbf16>
    %cst_8 = arith.constant dense<0.000000e+00> : vector<8x128xf32>
    %11 = tpu.matmul %9, %10, %cst_8 {dimension_numbers = #tpu.dot_dimension_numbers<[1], [0], [0], [1], [0, 0, 1, 1], [], []>} : vector<8x128xbf16>, vector<128x128xbf16>, vector<8x128xf32> -> vector<8x128xf32>
    %c0_9 = arith.constant 0 : index
    %c0_10 = arith.constant 0 : index
    %12 = vector.load %arg5[%c0_9, %c0_10] : memref<1x128xf32, #tpu.memory_space<vmem>>, vector<1x128xf32>
    %13 = vector.broadcast %12 : vector<1x128xf32> to vector<8x128xf32>
    %14 = arith.addf %11, %13 : vector<8x128xf32>
    %cst_11 = arith.constant 0.000000e+00 : f32
    %15 = vector.broadcast %cst_11 : f32 to vector<8x128xf32>
    %16 = arith.maximumf %14, %15 : vector<8x128xf32>
    %17 = arith.truncf %16 : vector<8x128xf32> to vector<8x128xbf16>
    %c0_12 = arith.constant 0 : index
    %c0_13 = arith.constant 0 : index
    %18 = vector.load %arg6[%c0_12, %c0_13] : memref<128x8xbf16, #tpu.memory_space<vmem>>, vector<128x8xbf16>
    %cst_14 = arith.constant dense<0.000000e+00> : vector<8x8xf32>
    %19 = tpu.matmul %17, %18, %cst_14 {dimension_numbers = #tpu.dot_dimension_numbers<[1], [0], [0], [1], [0, 0, 1, 1], [], []>} : vector<8x128xbf16>, vector<128x8xbf16>, vector<8x8xf32> -> vector<8x8xf32>
    %c0_15 = arith.constant 0 : index
    %c0_16 = arith.constant 0 : index
    %20 = vector.load %arg7[%c0_15, %c0_16] : memref<1x8xf32, #tpu.memory_space<vmem>>, vector<1x8xf32>
    %21 = vector.broadcast %20 : vector<1x8xf32> to vector<8x8xf32>
    %22 = arith.addf %19, %21 : vector<8x8xf32>
    %c0_17 = arith.constant 0 : index
    %c0_18 = arith.constant 0 : index
    %23 = vector.load %arg8[%c0_17, %c0_18] : memref<8x8xf32, #tpu.memory_space<vmem>>, vector<8x8xf32>
    tpu.vector_store %arg8[%c0_17, %c0_18], %22 {strides = array<i32>} : memref<8x8xf32, #tpu.memory_space<vmem>>, vector<8x8xf32>,
    return
  }
  func.func @transform_0(%arg0: i32) -> (i32, i32) {
    %c0_i32 = arith.constant 0 : i32
    %c0_i32_0 = arith.constant 0 : i32
    return %arg0, %c0_i32 : i32, i32
  }
  func.func @transform_1(%arg0: i32) -> (i32, i32) {
    %c0_i32 = arith.constant 0 : i32
    %c0_i32_0 = arith.constant 0 : i32
    %c0_i32_1 = arith.constant 0 : i32
    return %c0_i32, %c0_i32_0 : i32, i32
  }
  func.func @transform_2(%arg0: i32) -> (i32, i32) {
    %c0_i32 = arith.constant 0 : i32
    %c0_i32_0 = arith.constant 0 : i32
    %c0_i32_1 = arith.constant 0 : i32
    return %c0_i32, %c0_i32_0 : i32, i32
  }
  func.func @transform_3(%arg0: i32) -> (i32, i32) {
    %c0_i32 = arith.constant 0 : i32
    %c0_i32_0 = arith.constant 0 : i32
    %c0_i32_1 = arith.constant 0 : i32
    return %c0_i32, %c0_i32_0 : i32, i32
  }
  func.func @transform_4(%arg0: i32) -> (i32, i32) {
    %c0_i32 = arith.constant 0 : i32
    %c0_i32_0 = arith.constant 0 : i32
    %c0_i32_1 = arith.constant 0 : i32
    return %c0_i32, %c0_i32_0 : i32, i32
  }
  func.func @transform_5(%arg0: i32) -> (i32, i32) {
    %c0_i32 = arith.constant 0 : i32
    %c0_i32_0 = arith.constant 0 : i32
    %c0_i32_1 = arith.constant 0 : i32
    return %c0_i32, %c0_i32_0 : i32, i32
  }
  func.func @transform_6(%arg0: i32) -> (i32, i32) {
    %c0_i32 = arith.constant 0 : i32
    %c0_i32_0 = arith.constant 0 : i32
    %c0_i32_1 = arith.constant 0 : i32
    return %c0_i32, %c0_i32_0 : i32, i32
  }
  func.func @transform_7(%arg0: i32) -> (i32, i32) {
    %c0_i32 = arith.constant 0 : i32
    %c0_i32_0 = arith.constant 0 : i32
    return %arg0, %c0_i32 : i32, i32
  }
}

</mosaic_0001>

<llo_original>
// kernel: apk_classifier_forward.1
$region0: #{apk_classifier_forward.1}
  #allocation0 [shape = 'u32[]', space=smem, size = 0x4, offset = 0x4, fixed_abs, tag = 'smem constant byte address 0x4 - core index']
  #allocation1 [shape = 'u32[72,128]{1,0:T(1,128)}', space=vmem, size = 0x9000, scoped, tag = 'internal scratch']
  %s0 = inlined_call_operand.vmem [shape: f32[8,32], index: 0, kind: input, shape index: {}]
  %s1 = inlined_call_operand.hbm [shape: bf16[32,128], index: 1, kind: input, shape index: {}]
  %s2 = inlined_call_operand.hbm [shape: f32[1,128], index: 2, kind: input, shape index: {}]
  %s3 = inlined_call_operand.vmem [shape: bf16[128,128], index: 3, kind: input, shape index: {}]
  %s4 = inlined_call_operand.hbm [shape: f32[1,128], index: 4, kind: input, shape index: {}]
  %s5 = inlined_call_operand.vmem [shape: bf16[128,8], index: 5, kind: input, shape index: {}]
  %s6 = inlined_call_operand.hbm [shape: f32[1,8], index: 6, kind: input, shape index: {}]
  %s7 = inlined_call_operand.vmem [shape: f32[8,8], index: 7, kind: output, shape index: {}]
  %s8 = sld [smem:[#allocation0]]
  $region54: #{apk_classifier_forward.1} parent=0
    _
  %s10 = ssub.s32 1, %s8
  %s11 = scalar_select 0, %s10, %s8
  $region1: #{apk_classifier_forward.1} parent=0
    #allocation2 [shape = 'u8[8192]{0}', space=vmem, size = 0x2000, scoped, tag = 'input window, operand 1, single buffered']
    #allocation3 [shape = 's32[1]{0}', space=sflag, size = 0x4, scoped, tag = 'scoped memory for apk_classifier_forward.1']
    #allocation4 [shape = 'u8[512]{0}', space=vmem, size = 0x400, scoped, tag = 'input window, operand 2, single buffered']
    #allocation5 [shape = 's32[1]{0}', space=sflag, size = 0x4, scoped, tag = 'scoped memory for apk_classifier_forward.1']
    #allocation6 [shape = 'u8[512]{0}', space=vmem, size = 0x400, scoped, tag = 'input window, operand 4, single buffered']
    #allocation7 [shape = 'u8[512]{0}', space=vmem, size = 0x400, scoped, tag = 'input window, operand 6, single buffered']
    #allocation8 [shape = 's32[1]{0}', space=sflag, size = 0x4, scoped, tag = 'scoped memory for apk_classifier_forward.1']
    %12 = vsyncpa [#allocation3], 0
    %13 = vsyncpa [#allocation5], 0
    %14 = vsyncpa [#allocation8], 0
    // Predicated region
    $region2: #{apk_classifier_forward.1} parent=1 // pred_check
      _
    $region3: #{apk_classifier_forward.1} parent=1 // pred_check_branch
      %16 = sbr.rel (0) target = $region5
    $region4: #{apk_classifier_forward.1} parent=1 // pred_region
      _
    $region5: #{apk_classifier_forward.1} parent=1 // pred_fallthru
      _
    // Predicated region
    $region6: #{apk_classifier_forward.1} parent=1 // pred_check
      _
    $region7: #{apk_classifier_forward.1} parent=1 // pred_check_branch
      %18 = sbr.rel (0) target = $region9
    $region8: #{apk_classifier_forward.1} parent=1 // pred_region
      %20 = vsyncadd [#allocation3], 0
      %s21 = sshll.u32 %s1, 4
      %s22 = int_to_ptr.hbm [resolvable:$true] %s21
      %s23 = sshll.u32 [#allocation2], 4
      %s24 = int_to_ptr.vmem [resolvable:$true] %s23
      %29 = dma.hbm_to_vmem [thread:$0]  %s22, 256, %s24, [#allocation3], 64, 64, 4
    $region9: #{apk_classifier_forward.1} parent=1 // pred_fallthru
      _
    // Predicated region
    $region10: #{apk_classifier_forward.1} parent=1 // pred_check
      _
    $region11: #{apk_classifier_forward.1} parent=1 // pred_check_branch
      %31 = sbr.rel (0) target = $region13
    $region12: #{apk_classifier_forward.1} parent=1 // pred_region
      %33 = vsyncadd [#allocation5], 0
      %s35 = sshll.u32 %s2, 4
      %s36 = int_to_ptr.hbm [resolvable:$true] %s35
      %s37 = sshll.u32 [#allocation4], 4
      %s38 = int_to_ptr.vmem [resolvable:$true] %s37
      %40 = dma.hbm_to_vmem [thread:$0]  %s36, 16, %s38, [#allocation5]
    $region13: #{apk_classifier_forward.1} parent=1 // pred_fallthru
      _
    // Predicated region
    $region14: #{apk_classifier_forward.1} parent=1 // pred_check
      _
    $region15: #{apk_classifier_forward.1} parent=1 // pred_check_branch
      %42 = sbr.rel (0) target = $region17
    $region16: #{apk_classifier_forward.1} parent=1 // pred_region
      _
    $region17: #{apk_classifier_forward.1} parent=1 // pred_fallthru
      _
    // Predicated region
    $region18: #{apk_classifier_forward.1} parent=1 // pred_check
      _
    $region19: #{apk_classifier_forward.1} parent=1 // pred_check_branch
      %44 = sbr.rel (0) target = $region21
    $region20: #{apk_classifier_forward.1} parent=1 // pred_region
      %46 = vsyncadd [#allocation5], 0
      %s48 = sshll.u32 %s4, 4
      %s49 = int_to_ptr.hbm [resolvable:$true] %s48
      %s50 = sshll.u32 [#allocation6], 4
      %s51 = int_to_ptr.vmem [resolvable:$true] %s50
      %53 = dma.hbm_to_vmem [thread:$0]  %s49, 16, %s51, [#allocation5]
    $region21: #{apk_classifier_forward.1} parent=1 // pred_fallthru
      _
    // Predicated region
    $region22: #{apk_classifier_forward.1} parent=1 // pred_check
      _
    $region23: #{apk_classifier_forward.1} parent=1 // pred_check_branch
      %55 = sbr.rel (0) target = $region25
    $region24: #{apk_classifier_forward.1} parent=1 // pred_region
      _
    $region25: #{apk_classifier_forward.1} parent=1 // pred_fallthru
      _
    // Predicated region
    $region26: #{apk_classifier_forward.1} parent=1 // pred_check
      _
    $region27: #{apk_classifier_forward.1} parent=1 // pred_check_branch
      %57 = sbr.rel (0) target = $region29
    $region28: #{apk_classifier_forward.1} parent=1 // pred_region
      %59 = vsyncadd [#allocation8], 0
      %s61 = sshll.u32 %s6, 4
      %s62 = int_to_ptr.hbm [resolvable:$true] %s61
      %s63 = sshll.u32 [#allocation7], 4
      %s64 = int_to_ptr.vmem [resolvable:$true] %s63
      %66 = dma.hbm_to_vmem [thread:$0]  %s62, 16, %s64, [#allocation8]
    $region29: #{apk_classifier_forward.1} parent=1 // pred_fallthru
      _
    // Predicated region
    $region30: #{apk_classifier_forward.1} parent=1 // pred_check
      _
    $region31: #{apk_classifier_forward.1} parent=1 // pred_check_branch
      %68 = sbr.rel (0) target = $region33
    $region32: #{apk_classifier_forward.1} parent=1 // pred_region
      %70 = dma.done [#allocation3], 256
    $region33: #{apk_classifier_forward.1} parent=1 // pred_fallthru
      _
    // Predicated region
    $region34: #{apk_classifier_forward.1} parent=1 // pred_check
      _
    $region35: #{apk_classifier_forward.1} parent=1 // pred_check_branch
      %72 = sbr.rel (0) target = $region37
    $region36: #{apk_classifier_forward.1} parent=1 // pred_region
      %74 = dma.done [#allocation5], 16
    $region37: #{apk_classifier_forward.1} parent=1 // pred_fallthru
      _
    // Predicated region
    $region38: #{apk_classifier_forward.1} parent=1 // pred_check
      _
    $region39: #{apk_classifier_forward.1} parent=1 // pred_check_branch
      %76 = sbr.rel (0) target = $region41
    $region40: #{apk_classifier_forward.1} parent=1 // pred_region
      %78 = dma.done [#allocation5], 16
    $region41: #{apk_classifier_forward.1} parent=1 // pred_fallthru
      _
    // Predicated region
    $region42: #{apk_classifier_forward.1} parent=1 // pred_check
      _
    $region43: #{apk_classifier_forward.1} parent=1 // pred_check_branch
      %80 = sbr.rel (0) target = $region45
    $region44: #{apk_classifier_forward.1} parent=1 // pred_region
      %82 = dma.done [#allocation8], 16
    $region45: #{apk_classifier_forward.1} parent=1 // pred_fallthru
      _
    %v84 = vld [vmem:[%s0] sm:$0xff]
    %v85 = vpack.c.bf16 %v84, %v84
    %v86 = vld [vmem:[#allocation2] sm:$0xf]
    %v87 = vld [vmem:[#allocation2 + $0x4] sm:$0xf]
    %v88 = vld [vmem:[#allocation2 + $0x8] sm:$0xf]
    %v89 = vld [vmem:[#allocation2 + $0xc] sm:$0xf]
    %v90 = vld [vmem:[#allocation4] sm:$0x1]
    %v92 = vperm.slane %v90, 0
    %v98 = vunpack.c.l.b16 %v86
    %v99 = vunpack.c.l.b16 %v87
    %v100 = vunpack.c.l.b16 %v88
    %v101 = vunpack.c.l.b16 %v89
    %v102 = vpack.c.b16 %v99, %v98
    %v103 = vpack.c.b16 %v101, %v100
    %vm106 = vcmask 261120
    %v108 = vsel %vm106, %v85, 0
    %110 = vmatpush.bf16.msra.mxu0 0
    %111 = vmatpush.bf16.msra.mxu0 0
    %112 = vmatpush.bf16.msra.mxu0 0
    %113 = vmatpush.bf16.msra.mxu0 0
    %114 = vmatpush.bf16.msra.mxu0 0
    %115 = vmatpush.bf16.msra.mxu0 0
    %116 = vmatpush.bf16.msra.mxu0 %v103
    %117 = vmatpush.bf16.msra.mxu0 %v102
    %118 = vmatmul.bf16.gmra.mxu0 %v108
    %v119 = vpop.f32.mrf.mxu0
    %v120 = vadd.f32 %v92, %v119
    %v121 = vpop.f32.mrf.mxu0
    %122 = vdwg.mxu0
    %v123 = vmax.f32 %v120, 0.0
    %v124 = vpack.c.bf16 %v123, %v123
    %v125 = vld [vmem:[%s3] sm:$0xf]
    %v126 = vld [vmem:[%s3 + $0x4] sm:$0xf]
    %v127 = vld [vmem:[%s3 + $0x8] sm:$0xf]
    %v128 = vld [vmem:[%s3 + $0xc] sm:$0xf]
    %v129 = vld [vmem:[%s3 + $0x10] sm:$0xf]
    %v130 = vld [vmem:[%s3 + $0x14] sm:$0xf]
    %v131 = vld [vmem:[%s3 + $0x18] sm:$0xf]
    %v132 = vld [vmem:[%s3 + $0x1c] sm:$0xf]
    %v133 = vld [vmem:[%s3 + $0x20] sm:$0xf]
    %v134 = vld [vmem:[%s3 + $0x24] sm:$0xf]
    %v135 = vld [vmem:[%s3 + $0x28] sm:$0xf]
    %v136 = vld [vmem:[%s3 + $0x2c] sm:$0xf]
    %v137 = vld [vmem:[%s3 + $0x30] sm:$0xf]
    %v138 = vld [vmem:[%s3 + $0x34] sm:$0xf]
    %v139 = vld [vmem:[%s3 + $0x38] sm:$0xf]
    %v140 = vld [vmem:[%s3 + $0x3c] sm:$0xf]
    %v141 = vld [vmem:[#allocation6] sm:$0x1]
    %v143 = vperm.slane %v141, 0
    %v161 = vunpack.c.l.b16 %v125
    %v162 = vunpack.c.l.b16 %v126
    %v163 = vunpack.c.l.b16 %v127
    %v164 = vunpack.c.l.b16 %v128
    %v165 = vunpack.c.l.b16 %v129
    %v166 = vunpack.c.l.b16 %v130
    %v167 = vunpack.c.l.b16 %v131
    %v168 = vunpack.c.l.b16 %v132
    %v169 = vunpack.c.l.b16 %v133
    %v170 = vunpack.c.l.b16 %v134
    %v171 = vunpack.c.l.b16 %v135
    %v172 = vunpack.c.l.b16 %v136
    %v173 = vunpack.c.l.b16 %v137
    %v174 = vunpack.c.l.b16 %v138
    %v175 = vunpack.c.l.b16 %v139
    %v176 = vunpack.c.l.b16 %v140
    %v177 = vpack.c.b16 %v162, %v161
    %v178 = vpack.c.b16 %v164, %v163
    %v179 = vpack.c.b16 %v166, %v165
    %v180 = vpack.c.b16 %v168, %v167
    %v181 = vpack.c.b16 %v170, %v169
    %v182 = vpack.c.b16 %v172, %v171
    %v183 = vpack.c.b16 %v174, %v173
    %v184 = vpack.c.b16 %v176, %v175
    %193 = vmatpush.bf16.msra.mxu0 %v184
    %194 = vmatpush.bf16.msra.mxu0 %v183
    %195 = vmatpush.bf16.msra.mxu0 %v182
    %196 = vmatpush.bf16.msra.mxu0 %v181
    %197 = vmatpush.bf16.msra.mxu0 %v180
    %198 = vmatpush.bf16.msra.mxu0 %v179
    %199 = vmatpush.bf16.msra.mxu0 %v178
    %200 = vmatpush.bf16.msra.mxu0 %v177
    %201 = vmatmul.bf16.gmra.mxu0 %v124
    %v202 = vpop.f32.mrf.mxu0
    %v203 = vadd.f32 %v143, %v202
    %v204 = vpop.f32.mrf.mxu0
    %205 = vdwg.mxu0
    %v206 = vmax.f32 %v203, 0.0
    %v207 = vpack.c.bf16 %v206, %v206
    %v208 = vld [vmem:[%s5] sm:$0xf]
    %v209 = vld [vmem:[%s5 + $0x4] sm:$0xf]
    %v210 = vld [vmem:[%s5 + $0x8] sm:$0xf]
    %v211 = vld [vmem:[%s5 + $0xc] sm:$0xf]
    %v212 = vld [vmem:[%s5 + $0x10] sm:$0xf]
    %v213 = vld [vmem:[%s5 + $0x14] sm:$0xf]
    %v214 = vld [vmem:[%s5 + $0x18] sm:$0xf]
    %v215 = vld [vmem:[%s5 + $0x1c] sm:$0xf]
    %v216 = vld [vmem:[%s5 + $0x20] sm:$0xf]
    %v217 = vld [vmem:[%s5 + $0x24] sm:$0xf]
    %v218 = vld [vmem:[%s5 + $0x28] sm:$0xf]
    %v219 = vld [vmem:[%s5 + $0x2c] sm:$0xf]
    %v220 = vld [vmem:[%s5 + $0x30] sm:$0xf]
    %v221 = vld [vmem:[%s5 + $0x34] sm:$0xf]
    %v222 = vld [vmem:[%s5 + $0x38] sm:$0xf]
    %v223 = vld [vmem:[%s5 + $0x3c] sm:$0xf]
    %v224 = vld [vmem:[#allocation7] sm:$0x1]
    %v226 = vperm.slane %v224, 0
    %v244 = vunpack.c.l.b16 %v208
    %v245 = vunpack.c.l.b16 %v209
    %v246 = vunpack.c.l.b16 %v210
    %v247 = vunpack.c.l.b16 %v211
    %v248 = vunpack.c.l.b16 %v212
    %v249 = vunpack.c.l.b16 %v213
    %v250 = vunpack.c.l.b16 %v214
    %v251 = vunpack.c.l.b16 %v215
    %v252 = vunpack.c.l.b16 %v216
    %v253 = vunpack.c.l.b16 %v217
    %v254 = vunpack.c.l.b16 %v218
    %v255 = vunpack.c.l.b16 %v219
    %v256 = vunpack.c.l.b16 %v220
    %v257 = vunpack.c.l.b16 %v221
    %v258 = vunpack.c.l.b16 %v222
    %v259 = vunpack.c.l.b16 %v223
    %v260 = vpack.c.b16 %v245, %v244
    %v261 = vpack.c.b16 %v247, %v246
    %v262 = vpack.c.b16 %v249, %v248
    %v263 = vpack.c.b16 %v251, %v250
    %v264 = vpack.c.b16 %v253, %v252
    %v265 = vpack.c.b16 %v255, %v254
    %v266 = vpack.c.b16 %v257, %v256
    %v267 = vpack.c.b16 %v259, %v258
    %276 = vmatpush.bf16.msra.mxu0 %v267
    %277 = vmatpush.bf16.msra.mxu0 %v266
    %278 = vmatpush.bf16.msra.mxu0 %v265
    %279 = vmatpush.bf16.msra.mxu0 %v264
    %280 = vmatpush.bf16.msra.mxu0 %v263
    %281 = vmatpush.bf16.msra.mxu0 %v262
    %282 = vmatpush.bf16.msra.mxu0 %v261
    %283 = vmatpush.bf16.msra.mxu0 %v260
    %284 = vmatmul.bf16.gmra.mxu0 %v207
    %v285 = vpop.f32.mrf.mxu0
    %v286 = vadd.f32 %v226, %v285
    %v287 = vpop.f32.mrf.mxu0
    %288 = vdwg.mxu0
    %vm289 = vcmask 64512
    %290 = vst.msk [vmem:[%s7] sm:$0xff] %vm289, %v286
    // Predicated region
    $region46: #{apk_classifier_forward.1} parent=1 // pred_check
      _
    $region47: #{apk_classifier_forward.1} parent=1 // pred_check_branch
      %292 = sbr.rel (0) target = $region49
    $region48: #{apk_classifier_forward.1} parent=1 // pred_region
      _
    $region49: #{apk_classifier_forward.1} parent=1 // pred_fallthru
      _
    // Predicated region
    $region50: #{apk_classifier_forward.1} parent=1 // pred_check
      _
    $region51: #{apk_classifier_forward.1} parent=1 // pred_check_branch
      %294 = sbr.rel (0) target = $region53
    $region52: #{apk_classifier_forward.1} parent=1 // pred_region
      _
    $region53: #{apk_classifier_forward.1} parent=1 // pred_fallthru
      _
    %295 = vsyncpa [#allocation3], 1
    %296 = vsyncpa [#allocation5], 1
    %297 = vsyncpa [#allocation8], 1

</llo_original>
